<compile_context>
chip_gen: v6e
topology: v6e:2x2x1
jax: 0.10.0
libtpu: 0.0.40
codegen_flags: <defaults>
</compile_context>

<pallas_src>
import math

import jax
import jax.numpy as jnp
from jax.experimental import pallas as pl
from jax.experimental.pallas import tpu as pltpu


def _recon_head_kernel(x_ref, w_ref, b_ref, o_ref):
    # x_ref: [tile, G*d_model]      w_ref: [G*d_model, G*patch_len]  (kron(I_G, W^T))
    # b_ref: [1, G*patch_len] f32   o_ref: [tile, G*patch_len]
    # TODO(synk): Dropout is identity in eval/deterministic mode; a training-mode
    # path would need pltpu.prng_seed/prng_random_bits masking here.
    acc = jnp.dot(x_ref[...], w_ref[...], preferred_element_type=jnp.float32)
    o_ref[...] = (acc + b_ref[...]).astype(o_ref.dtype)


def _sublane(dtype):
    # Minimum second-to-last block dim: 8 for 4-byte, 16 for 2-byte, 32 for 1-byte.
    return max(8, 32 // jnp.dtype(dtype).itemsize)


def _floor_to(v, m):
    return max(m, (v // m) * m)


def _ceil_to(v, m):
    return ((v + m - 1) // m) * m


def _choose_group(patch_len, d_model, itemsize, weight_cap_bytes):
    """Packing factor G: ideally Np = G*patch_len is an exact multiple of 128
    lanes (no masked partial stores); capped so the resident block-diagonal
    weight stays well under the VMEM budget."""
    if patch_len % 128 == 0:
        return 1
    g_ideal = 128 // math.gcd(patch_len, 128)
    g_max = int(math.floor(math.sqrt(weight_cap_bytes / float(d_model * patch_len * itemsize))))
    g_max = max(1, g_max)
    if g_ideal <= g_max:
        return g_ideal
    for g in range(g_max, 0, -1):              # prefer a lane-exact G if one fits
        if (g * patch_len) % 128 == 0:
            return g
    return g_max


def make_recon_head(weight, bias, *, compute_dtype=None, max_tile_rows=2048,
                    min_grid_steps=8, vmem_target_bytes=20 * 1024 * 1024):
    """Build the ReconHead forward.  weight: [patch_len, d_model] (PyTorch
    nn.Linear layout), bias: [patch_len].  Returns apply(x) mapping
    [bs, nvars, num_patch, d_model] -> [bs, nvars, num_patch, patch_len].

    All weight packing happens here, once, so the per-call pallas operands are
    stable constants."""
    patch_len, d_model = int(weight.shape[0]), int(weight.shape[1])
    compute_dtype = jnp.dtype(compute_dtype or weight.dtype)
    w_isz = compute_dtype.itemsize

    weight_cap = 4 * 1024 * 1024                     # per-buffer cap for kron(I_G, W^T)
    G = _choose_group(patch_len, d_model, w_isz, weight_cap)
    Kp = G * d_model
    Np = G * patch_len

    w_cast = weight.astype(compute_dtype)
    wT_plain = w_cast.T                              # (d_model, patch_len), tiny-M fallback
    b_f32 = bias.astype(jnp.float32)
    # Block-diagonal weight (built ONCE): turns G independent rows into one
    # lane-dense MXU row.
    w_bd = jnp.kron(jnp.eye(G, dtype=compute_dtype), w_cast.T)        # (Kp, Np)
    b_packed = jnp.tile(b_f32, G).reshape(1, Np)                       # (1, Np) f32

    def apply(x):
        if x.ndim != 4 or x.shape[-1] != d_model:
            raise ValueError(f"expected x of shape [bs, nvars, num_patch, {d_model}], got {x.shape}")
        bs, nvars, num_patch, _ = x.shape
        out_dtype = x.dtype
        in_isz = jnp.dtype(x.dtype).itemsize
        out_isz = jnp.dtype(out_dtype).itemsize
        sub = max(_sublane(x.dtype), _sublane(out_dtype))

        M = bs * nvars * num_patch

        # Tiny problems: not worth a kernel launch / avoid degenerate blocks.
        if M < sub * G:
            acc = jnp.dot(x.reshape(M, d_model), wT_plain,
                          preferred_element_type=jnp.float32)
            return (acc + b_f32).astype(out_dtype).reshape(bs, nvars, num_patch, patch_len)

        x2d = x.reshape(M, d_model)                   # free (row-major merge)
        r = M % G
        if r:
            # Only taken when M is not a multiple of G: the grouped view below
            # needs divisibility.  Costs one extra HBM pass over X; the common
            # aligned case (e.g. batch a multiple of 8) is fully zero-copy.
            x2d = jnp.pad(x2d, ((0, G - r), (0, 0)))
        MG = x2d.shape[0] // G
        xg = x2d.reshape(MG, Kp)                      # free

        # --- tile sizing: fill the VMEM budget after accounting for the
        # double-buffered resident weight/bias blocks (constant index_map is
        # still double-buffered by the BlockSpec pipeline), then cap so the
        # grid has >= min_grid_steps iterations for v7x megacore sharding.
        resident = 2 * (Kp * Np * w_isz + Np * 4)
        per_row = 2 * (Kp * in_isz + Np * out_isz)            # 2 pipeline buffers each
        stream_budget = max(per_row * sub, vmem_target_bytes - resident)
        tile_cap = _floor_to(stream_budget // per_row, sub)

        if MG >= sub * min_grid_steps:
            tile_split = _floor_to(MG // min_grid_steps, sub)
        else:
            tile_split = _ceil_to(MG, sub)
        tile = min(tile_cap, max_tile_rows, tile_split, _floor_to(MG, sub))
        tile = int(max(sub, (tile // sub) * sub))

        grid = (pl.cdiv(MG, tile),)                   # ragged last tile handled by Pallas

        # Advisory cost: true math flops (not the G-inflated zero-block flops).
        cost = pl.CostEstimate(
            flops=2 * M * d_model * patch_len,
            transcendentals=0,
            bytes_accessed=int(xg.size * in_isz + w_bd.size * w_isz
                               + b_packed.size * 4 + MG * Np * out_isz))

        vmem_need = (2 * tile * Kp * in_isz          # streamed X (double-buffered)
                     + 2 * tile * Np * out_isz       # streamed out (double-buffered)
                     + resident                      # weight + bias
                     + tile * Np * 4)                # f32 accumulator
        vmem_limit = int(vmem_need + (8 << 20))      # generous margin; << v7x 64 MiB

        outg = pl.pallas_call(
            _recon_head_kernel,
            out_shape=jax.ShapeDtypeStruct((MG, Np), out_dtype),
            grid_spec=pltpu.PrefetchScalarGridSpec(
                num_scalar_prefetch=0,
                grid=grid,
                in_specs=[
                    pl.BlockSpec((tile, Kp), lambda i: (i, 0)),   # streamed X tiles
                    pl.BlockSpec((Kp, Np), lambda i: (0, 0)),     # resident weight
                    pl.BlockSpec((1, Np), lambda i: (0, 0)),      # resident bias
                ],
                out_specs=pl.BlockSpec((tile, Np), lambda i: (i, 0)),
            ),
            compiler_params=pltpu.CompilerParams(
                dimension_semantics=("parallel",),    # row tiles independent -> megacore
                vmem_limit_bytes=vmem_limit),
            cost_estimate=cost,
        )(xg, w_bd, b_packed)

        out2d = outg.reshape(MG * G, patch_len)       # free reshape
        if r:
            out2d = out2d[:M]                         # touches only the small Y
        return out2d.reshape(bs, nvars, num_patch, patch_len)

    return jax.jit(apply)


def _reference(x, weight, bias):
    return (jnp.einsum("bvnd,pd->bvnp", x.astype(jnp.float32), weight.astype(jnp.float32))
            + bias.astype(jnp.float32))


if __name__ == "__main__":
    key = jax.random.PRNGKey(0)
    kx, kw, kb, kx2, kx3 = jax.random.split(key, 5)

    d_model, patch_len = 32, 16
    dropout = 0.1   # identity in deterministic/eval mode
    bound = 1.0 / (d_model ** 0.5)
    weight = jax.random.uniform(kw, (patch_len, d_model),
                                minval=-bound, maxval=bound, dtype=jnp.float32)
    bias = jax.random.uniform(kb, (patch_len,),
                              minval=-bound, maxval=bound, dtype=jnp.float32)

    head = make_recon_head(weight, bias)

    # 1) Aligned case (M % G == 0): fully zero-copy wrapper, single-tile grid.
    x1 = jax.random.normal(kx, (2, 4, 8, d_model), dtype=jnp.float32)
    out1 = jax.block_until_ready(head(x1))
    ref1 = _reference(x1, weight, bias)
    assert out1.shape == (2, 4, 8, patch_len)
    assert jnp.allclose(out1, ref1, atol=1e-5, rtol=1e-5)

    # 2) Ragged case: M % G != 0, multi-step grid with a ragged last tile.
    head_small_tiles = make_recon_head(weight, bias, max_tile_rows=8)
    x2 = jax.random.normal(kx2, (2, 3, 23, d_model), dtype=jnp.float32)
    out2 = jax.block_until_ready(head_small_tiles(x2))
    ref2 = _reference(x2, weight, bias)
    assert out2.shape == (2, 3, 23, patch_len)
    assert jnp.allclose(out2, ref2, atol=1e-5, rtol=1e-5)

    # 3) bf16 streaming path (halves HBM bytes; MXU-native dtype), f32 accumulation.
    d_model3 = 64
    w3 = jax.random.uniform(kw, (patch_len, d_model3),
                            minval=-bound, maxval=bound, dtype=jnp.float32).astype(jnp.bfloat16)
    b3 = bias.astype(jnp.bfloat16)
    head_bf16 = make_recon_head(w3, b3, compute_dtype=jnp.bfloat16)
    x3 = jax.random.normal(kx3, (2, 4, 16, d_model3), dtype=jnp.float32).astype(jnp.bfloat16)
    out3 = jax.block_until_ready(head_bf16(x3))
    ref3 = _reference(x3, w3, b3)
    assert out3.shape == (2, 4, 16, patch_len)
    assert jnp.allclose(out3.astype(jnp.float32), ref3, atol=3e-2, rtol=3e-2)

    # 4) Tiny-M fallback (pure jnp, no kernel launch).
    x4 = jax.random.normal(kx, (1, 1, 4, d_model), dtype=jnp.float32)
    out4 = jax.block_until_ready(head(x4))
    ref4 = _reference(x4, weight, bias)
    assert out4.shape == (1, 1, 4, patch_len)
    assert jnp.allclose(out4, ref4, atol=1e-5, rtol=1e-5)

    print("KERNEL_OK")
</pallas_src>

<mosaic_0001>
module attributes {stable_mosaic.version = 11 : i64} {
  func.func @_recon_head_kernel(%arg0: i32, %arg1: memref<8x256xf32, #tpu.memory_space<vmem>>, %arg2: memref<256x128xf32, #tpu.memory_space<vmem>>, %arg3: memref<1x128xf32, #tpu.memory_space<vmem>>, %arg4: memref<8x128xf32, #tpu.memory_space<vmem>>) attributes {dimension_semantics = [#tpu.dimension_semantics<parallel>], iteration_bounds = array<i64: 1>, scalar_prefetch = 0 : i64, scratch_operands = 0 : i64, tpu.core_type = #tpu.core_type<tc>, window_params = [{transform_indices = @transform_0, window_bounds = array<i64: 8, 256>}, {pipeline_mode = #tpu.pipeline_mode<synchronous>, transform_indices = @transform_1, window_bounds = array<i64: 256, 128>}, {pipeline_mode = #tpu.pipeline_mode<synchronous>, transform_indices = @transform_2, window_bounds = array<i64: 1, 128>}, {transform_indices = @transform_3, window_bounds = array<i64: 8, 128>}]} {
    %c0 = arith.constant 0 : index
    %c0_0 = arith.constant 0 : index
    %0 = vector.load %arg1[%c0, %c0_0] : memref<8x256xf32, #tpu.memory_space<vmem>>, vector<8x256xf32>
    %c0_1 = arith.constant 0 : index
    %c0_2 = arith.constant 0 : index
    %1 = vector.load %arg2[%c0_1, %c0_2] : memref<256x128xf32, #tpu.memory_space<vmem>>, vector<256x128xf32>
    %cst = arith.constant dense<0.000000e+00> : vector<8x128xf32>
    %2 = tpu.matmul %0, %1, %cst {dimension_numbers = #tpu.dot_dimension_numbers<[1], [0], [0], [1], [0, 0, 1, 1], [], []>} : vector<8x256xf32>, vector<256x128xf32>, vector<8x128xf32> -> vector<8x128xf32>
    %c0_3 = arith.constant 0 : index
    %c0_4 = arith.constant 0 : index
    %3 = vector.load %arg3[%c0_3, %c0_4] : memref<1x128xf32, #tpu.memory_space<vmem>>, vector<1x128xf32>
    %4 = vector.broadcast %3 : vector<1x128xf32> to vector<8x128xf32>
    %5 = arith.addf %2, %4 : vector<8x128xf32>
    %c0_5 = arith.constant 0 : index
    %c0_6 = arith.constant 0 : index
    %6 = vector.load %arg4[%c0_5, %c0_6] : memref<8x128xf32, #tpu.memory_space<vmem>>, vector<8x128xf32>
    tpu.vector_store %arg4[%c0_5, %c0_6], %5 {strides = array<i32>} : memref<8x128xf32, #tpu.memory_space<vmem>>, vector<8x128xf32>,
    return
  }
  func.func @transform_0(%arg0: i32) -> (i32, i32) {
    %c0_i32 = arith.constant 0 : i32
    %c0_i32_0 = arith.constant 0 : i32
    return %arg0, %c0_i32 : i32, i32
  }
  func.func @transform_1(%arg0: i32) -> (i32, i32) {
    %c0_i32 = arith.constant 0 : i32
    %c0_i32_0 = arith.constant 0 : i32
    %c0_i32_1 = arith.constant 0 : i32
    return %c0_i32, %c0_i32_0 : i32, i32
  }
  func.func @transform_2(%arg0: i32) -> (i32, i32) {
    %c0_i32 = arith.constant 0 : i32
    %c0_i32_0 = arith.constant 0 : i32
    %c0_i32_1 = arith.constant 0 : i32
    return %c0_i32, %c0_i32_0 : i32, i32
  }
  func.func @transform_3(%arg0: i32) -> (i32, i32) {
    %c0_i32 = arith.constant 0 : i32
    %c0_i32_0 = arith.constant 0 : i32
    return %arg0, %c0_i32 : i32, i32
  }
}

</mosaic_0001>

<llo_original>
// kernel: apply.1
$region0: #{apply.1}
  #allocation0 [shape = 'u32[]', space=smem, size = 0x4, offset = 0x4, fixed_abs, tag = 'smem constant byte address 0x4 - core index']
  #allocation1 [shape = 'u32[144,128]{1,0:T(1,128)}', space=vmem, size = 0x12000, scoped, tag = 'internal scratch']
  %s0 = inlined_call_operand.vmem [shape: f32[8,256], index: 0, kind: input, shape index: {}]
  %s1 = inlined_call_operand.hbm [shape: f32[256,128], index: 1, kind: input, shape index: {}]
  %s2 = inlined_call_operand.vmem [shape: f32[1,128], index: 2, kind: input, shape index: {}]
  %s3 = inlined_call_operand.vmem [shape: f32[8,128], index: 3, kind: output, shape index: {}]
  %s4 = sld [smem:[#allocation0]]
  $region26: #{apply.1} parent=0
    _
  %s6 = ssub.s32 1, %s4
  %s7 = scalar_select 0, %s6, %s4
  $region1: #{apply.1} parent=0
    #allocation2 [shape = 'u8[131072]{0}', space=vmem, size = 0x20000, scoped, tag = 'input window, operand 1, single buffered']
    #allocation3 [shape = 's32[1]{0}', space=sflag, size = 0x4, scoped, tag = 'scoped memory for apply.1']
    %8 = vsyncpa [#allocation3], 0
    // Predicated region
    $region2: #{apply.1} parent=1 // pred_check
      _
    $region3: #{apply.1} parent=1 // pred_check_branch
      %10 = sbr.rel (0) target = $region5
    $region4: #{apply.1} parent=1 // pred_region
      _
    $region5: #{apply.1} parent=1 // pred_fallthru
      _
    // Predicated region
    $region6: #{apply.1} parent=1 // pred_check
      _
    $region7: #{apply.1} parent=1 // pred_check_branch
      %12 = sbr.rel (0) target = $region9
    $region8: #{apply.1} parent=1 // pred_region
      %s14 = ssub.s32 4096, 4096
      %15 = vsyncadd [#allocation3], %s14
      %s16 = sshll.u32 [#allocation2], 4
      %s17 = int_to_ptr.vmem [resolvable:$true] %s16
      %22 = dma.hbm_to_vmem [thread:$0]  %s1, 4096, %s17, [#allocation3], 128, 128, 8
    $region9: #{apply.1} parent=1 // pred_fallthru
      _
    // Predicated region
    $region10: #{apply.1} parent=1 // pred_check
      _
    $region11: #{apply.1} parent=1 // pred_check_branch
      %24 = sbr.rel (0) target = $region13
    $region12: #{apply.1} parent=1 // pred_region
      _
    $region13: #{apply.1} parent=1 // pred_fallthru
      _
    // Predicated region
    $region14: #{apply.1} parent=1 // pred_check
      _
    $region15: #{apply.1} parent=1 // pred_check_branch
      %26 = sbr.rel (0) target = $region17
    $region16: #{apply.1} parent=1 // pred_region
      %27 = dma.done [#allocation3], 4096
    $region17: #{apply.1} parent=1 // pred_fallthru
      _
    %v28 = vld [vmem:[%s0] sm:$0xff]
    %v29 = vld [vmem:[%s0 + $0x8] sm:$0xff]
    %v30 = vld [vmem:[#allocation2] sm:$0xff]
    %v31 = vld [vmem:[#allocation2 + $0x8] sm:$0xff]
    %v32 = vld [vmem:[#allocation2 + $0x10] sm:$0xff]
    %v33 = vld [vmem:[#allocation2 + $0x18] sm:$0xff]
    %v34 = vld [vmem:[#allocation2 + $0x20] sm:$0xff]
    %v35 = vld [vmem:[#allocation2 + $0x28] sm:$0xff]
    %v36 = vld [vmem:[#allocation2 + $0x30] sm:$0xff]
    %v37 = vld [vmem:[#allocation2 + $0x38] sm:$0xff]
    %v38 = vld [vmem:[#allocation2 + $0x40] sm:$0xff]
    %v39 = vld [vmem:[#allocation2 + $0x48] sm:$0xff]
    %v40 = vld [vmem:[#allocation2 + $0x50] sm:$0xff]
    %v41 = vld [vmem:[#allocation2 + $0x58] sm:$0xff]
    %v42 = vld [vmem:[#allocation2 + $0x60] sm:$0xff]
    %v43 = vld [vmem:[#allocation2 + $0x68] sm:$0xff]
    %v44 = vld [vmem:[#allocation2 + $0x70] sm:$0xff]
    %v45 = vld [vmem:[#allocation2 + $0x78] sm:$0xff]
    %v46 = vld [vmem:[#allocation2 + $0x80] sm:$0xff]
    %v47 = vld [vmem:[#allocation2 + $0x88] sm:$0xff]
    %v48 = vld [vmem:[#allocation2 + $0x90] sm:$0xff]
    %v49 = vld [vmem:[#allocation2 + $0x98] sm:$0xff]
    %v50 = vld [vmem:[#allocation2 + $0xa0] sm:$0xff]
    %v51 = vld [vmem:[#allocation2 + $0xa8] sm:$0xff]
    %v52 = vld [vmem:[#allocation2 + $0xb0] sm:$0xff]
    %v53 = vld [vmem:[#allocation2 + $0xb8] sm:$0xff]
    %v54 = vld [vmem:[#allocation2 + $0xc0] sm:$0xff]
    %v55 = vld [vmem:[#allocation2 + $0xc8] sm:$0xff]
    %v56 = vld [vmem:[#allocation2 + $0xd0] sm:$0xff]
    %v57 = vld [vmem:[#allocation2 + $0xd8] sm:$0xff]
    %v58 = vld [vmem:[#allocation2 + $0xe0] sm:$0xff]
    %v59 = vld [vmem:[#allocation2 + $0xe8] sm:$0xff]
    %v60 = vld [vmem:[#allocation2 + $0xf0] sm:$0xff]
    %v61 = vld [vmem:[#allocation2 + $0xf8] sm:$0xff]
    %v62 = vld [vmem:[%s2] sm:$0x1]
    %v64 = vlaneseq
    %v65 = vshrl.u32 %v64, 7
    %v66 = vsub.s32 0, %v65
    %v67 = vrot.slane %v62, %v66
    %69 = vmatprep.subr.mxu0 0.0
    %70 = vmatpush1.msra.mxu0 %v45
    %71 = vmatprep.subr.mxu0 0.0
    %72 = vmatpush1.msra.mxu0 %v44
    %73 = vmatprep.subr.mxu0 0.0
    %74 = vmatpush1.msra.mxu0 %v43
    %75 = vmatprep.subr.mxu0 0.0
    %76 = vmatpush1.msra.mxu0 %v42
    %77 = vmatprep.subr.mxu0 0.0
    %78 = vmatpush1.msra.mxu0 %v41
    %79 = vmatprep.subr.mxu0 0.0
    %80 = vmatpush1.msra.mxu0 %v40
    %81 = vmatprep.subr.mxu0 0.0
    %82 = vmatpush1.msra.mxu0 %v39
    %83 = vmatprep.subr.mxu0 0.0
    %84 = vmatpush1.msra.mxu0 %v38
    %85 = vmatprep.subr.mxu0 0.0
    %86 = vmatpush1.msra.mxu0 %v37
    %87 = vmatprep.subr.mxu0 0.0
    %88 = vmatpush1.msra.mxu0 %v36
    %89 = vmatprep.subr.mxu0 0.0
    %90 = vmatpush1.msra.mxu0 %v35
    %91 = vmatprep.subr.mxu0 0.0
    %92 = vmatpush1.msra.mxu0 %v34
    %93 = vmatprep.subr.mxu0 0.0
    %94 = vmatpush1.msra.mxu0 %v33
    %95 = vmatprep.subr.mxu0 0.0
    %96 = vmatpush1.msra.mxu0 %v32
    %97 = vmatprep.subr.mxu0 0.0
    %98 = vmatpush1.msra.mxu0 %v31
    %99 = vmatprep.subr.mxu0 0.0
    %100 = vmatpush1.msra.mxu0 %v30
    %101 = vmatprep.subr.mxu0 0.0
    %102 = vmatpush2.msra.mxu0 %v61
    %103 = vmatprep.subr.mxu0 0.0
    %104 = vmatpush2.msra.mxu0 %v60
    %105 = vmatprep.subr.mxu0 0.0
    %106 = vmatpush2.msra.mxu0 %v59
    %107 = vmatprep.subr.mxu0 0.0
    %108 = vmatpush2.msra.mxu0 %v58
    %109 = vmatprep.subr.mxu0 0.0
    %110 = vmatpush2.msra.mxu0 %v57
    %111 = vmatprep.subr.mxu0 0.0
    %112 = vmatpush2.msra.mxu0 %v56
    %113 = vmatprep.subr.mxu0 0.0
    %114 = vmatpush2.msra.mxu0 %v55
    %115 = vmatprep.subr.mxu0 0.0
    %116 = vmatpush2.msra.mxu0 %v54
    %117 = vmatprep.subr.mxu0 0.0
    %118 = vmatpush2.msra.mxu0 %v53
    %119 = vmatprep.subr.mxu0 0.0
    %120 = vmatpush2.msra.mxu0 %v52
    %121 = vmatprep.subr.mxu0 0.0
    %122 = vmatpush2.msra.mxu0 %v51
    %123 = vmatprep.subr.mxu0 0.0
    %124 = vmatpush2.msra.mxu0 %v50
    %125 = vmatprep.subr.mxu0 0.0
    %126 = vmatpush2.msra.mxu0 %v49
    %127 = vmatprep.subr.mxu0 0.0
    %128 = vmatpush2.msra.mxu0 %v48
    %129 = vmatprep.subr.mxu0 0.0
    %130 = vmatpush2.msra.mxu0 %v47
    %131 = vmatprep.subr.mxu0 0.0
    %132 = vmatpush2.msra.mxu0 %v46
    %133 = vmatprep.mubr.f32.mxu0 %v29
    %134 = vmatmul.mubr.f32.gmra.mxu0 %v28
    %v135 = vpop.f32.mrf.mxu0
    %v136 = vadd.f32 %v67, %v135
    %v137 = vpop.f32.mrf.mxu0
    %138 = vdwg.mxu0
    %139 = vst [vmem:[%s3] sm:$0xff] %v136
    // Predicated region
    $region18: #{apply.1} parent=1 // pred_check
      _
    $region19: #{apply.1} parent=1 // pred_check_branch
      %141 = sbr.rel (0) target = $region21
    $region20: #{apply.1} parent=1 // pred_region
      _
    $region21: #{apply.1} parent=1 // pred_fallthru
      _
    // Predicated region
    $region22: #{apply.1} parent=1 // pred_check
      _
    $region23: #{apply.1} parent=1 // pred_check_branch
      %143 = sbr.rel (0) target = $region25
    $region24: #{apply.1} parent=1 // pred_region
      _
    $region25: #{apply.1} parent=1 // pred_fallthru
      _
    %144 = vsyncpa [#allocation3], 1

</llo_original>
